<compile_context>
chip_gen: v5e
topology: v5e:2x2
jax: 0.10.0
libtpu: 0.0.40
codegen_flags: <defaults>
</compile_context>

<pallas_src>
import functools

import jax
import jax.numpy as jnp
from jax.experimental import pallas as pl
from jax.experimental.pallas import tpu as pltpu


# ----------------------------- Pallas kernels ------------------------------

def _l2_normalize_kernel(x_ref, o_ref):
    # power == 2 fast path: x * rsqrt(sum(x*x))  (rsqrt lowers to the EUP)
    x = x_ref[...]
    sumsq = jnp.sum(x * x, axis=-1, keepdims=True)
    o_ref[...] = x * jax.lax.rsqrt(sumsq)


def _lp_normalize_kernel(power, x_ref, o_ref):
    # Generic power, kept literal to the PyTorch module (no abs, no eps).
    x = x_ref[...]
    s = jnp.sum(jnp.power(x, power), axis=-1, keepdims=True)
    o_ref[...] = x * jnp.power(s, -1.0 / power)


# ------------------------------- wrappers -----------------------------------

def _choose_row_tile(n_rows, d, *, bytes_per_elem=4, buf_budget_bytes=8 << 20):
    """Largest row tile that keeps double-buffered in+out under the budget."""
    # Pallas double-buffers the input and the output: ~4 live tiles of (T, d).
    max_rows = max(8, buf_budget_bytes // (4 * d * bytes_per_elem))
    tile = min(n_rows, min(1024, max_rows))
    tile = max(8, (tile // 8) * 8)          # sublane multiple
    return tile


def _normalize_rows(x2d, power):
    """Normalize each row of x2d (N, D) over its last dim with the given power."""
    n, d = x2d.shape
    tile = _choose_row_tile(n, d)

    if power == 2:
        kernel = _l2_normalize_kernel
    else:
        kernel = functools.partial(_lp_normalize_kernel, float(power))

    # Explicit VMEM budget with headroom; tiles above are derived against an
    # 8 MiB buffer budget, so this is comfortably within v7x's 64 MiB VMEM.
    needed = 4 * tile * d * 4
    vmem_limit = min(max(needed + (8 << 20), 16 << 20), 64 << 20)

    return pl.pallas_call(
        kernel,
        grid=(pl.cdiv(n, tile),),
        in_specs=[pl.BlockSpec((tile, d), lambda i: (i, 0))],
        out_specs=pl.BlockSpec((tile, d), lambda i: (i, 0)),
        out_shape=jax.ShapeDtypeStruct((n, d), x2d.dtype),
        compiler_params=pltpu.CompilerParams(
            dimension_semantics=("parallel",),
            vmem_limit_bytes=vmem_limit,
        ),
    )(x2d)


def normalize(x, power=2):
    """Pallas equivalent of Normalize(power).forward(x): Lp-normalize over dim=1."""
    if x.ndim < 2:
        raise ValueError("Normalize expects an input with at least 2 dims")
    # Layout plumbing only: put the normalized axis on lanes, flatten the rest
    # into rows, run the single tiled kernel, then undo.
    xm = jnp.moveaxis(x, 1, -1)
    lead_shape = xm.shape[:-1]
    d = xm.shape[-1]
    y2d = _normalize_rows(xm.reshape(-1, d), power)
    y = y2d.reshape(*lead_shape, d)
    return jnp.moveaxis(y, -1, 1)


# --------------------------------- main -------------------------------------

if __name__ == "__main__":
    key = jax.random.PRNGKey(0)
    k1, k2 = jax.random.split(key)

    # Primary case: feature embeddings (batch, feat_dim), normalized over dim=1
    # (how Normalize is used in LEModel).  Lane-dense: D is a multiple of 128.
    B, D = 512, 256
    x = jax.random.normal(k1, (B, D), jnp.float32)
    out = normalize(x, power=2)
    jax.block_until_ready(out)

    ref = x / jnp.power(jnp.sum(jnp.power(x, 2.0), axis=1, keepdims=True), 0.5)
    assert out.shape == x.shape
    assert float(jnp.max(jnp.abs(out - ref))) < 1e-5

    # Secondary check: NCHW tensor, normalization over the channel axis (dim=1),
    # exercising the generic moveaxis/flatten wrapper path.
    x4 = jax.random.normal(k2, (2, 4, 16, 16), jnp.float32)
    out4 = normalize(x4, power=2)
    jax.block_until_ready(out4)
    ref4 = x4 / jnp.power(jnp.sum(jnp.power(x4, 2.0), axis=1, keepdims=True), 0.5)
    assert out4.shape == x4.shape
    assert float(jnp.max(jnp.abs(out4 - ref4))) < 1e-5

    print("KERNEL_OK")
</pallas_src>

<mosaic_0001>
module attributes {stable_mosaic.version = 11 : i64} {
  func.func @_l2_normalize_kernel(%arg0: i32, %arg1: memref<512x256xf32, #tpu.memory_space<vmem>>, %arg2: memref<512x256xf32, #tpu.memory_space<vmem>>) attributes {dimension_semantics = [#tpu.dimension_semantics<parallel>], iteration_bounds = array<i64: 1>, scalar_prefetch = 0 : i64, scratch_operands = 0 : i64, tpu.core_type = #tpu.core_type<tc>, window_params = [{transform_indices = @transform_0, window_bounds = array<i64: 512, 256>}, {transform_indices = @transform_1, window_bounds = array<i64: 512, 256>}]} {
    %c0 = arith.constant 0 : index
    %c0_0 = arith.constant 0 : index
    %0 = vector.load %arg1[%c0, %c0_0] : memref<512x256xf32, #tpu.memory_space<vmem>>, vector<512x256xf32>
    %1 = arith.mulf %0, %0 : vector<512x256xf32>
    %cst = arith.constant dense<0.000000e+00> : vector<512xf32>
    %2 = vector.multi_reduction <add>, %1, %cst [1] : vector<512x256xf32> to vector<512xf32>
    %3 = vector.shape_cast %2 : vector<512xf32> to vector<512x1xf32>
    %4 = math.rsqrt %3 : vector<512x1xf32>
    %5 = vector.broadcast %4 : vector<512x1xf32> to vector<512x256xf32>
    %6 = arith.mulf %0, %5 : vector<512x256xf32>
    %c0_1 = arith.constant 0 : index
    %c0_2 = arith.constant 0 : index
    %7 = vector.load %arg2[%c0_1, %c0_2] : memref<512x256xf32, #tpu.memory_space<vmem>>, vector<512x256xf32>
    tpu.vector_store %arg2[%c0_1, %c0_2], %6 {strides = array<i32>} : memref<512x256xf32, #tpu.memory_space<vmem>>, vector<512x256xf32>,
    return
  }
  func.func @transform_0(%arg0: i32) -> (i32, i32) {
    %c0_i32 = arith.constant 0 : i32
    %c0_i32_0 = arith.constant 0 : i32
    return %arg0, %c0_i32 : i32, i32
  }
  func.func @transform_1(%arg0: i32) -> (i32, i32) {
    %c0_i32 = arith.constant 0 : i32
    %c0_i32_0 = arith.constant 0 : i32
    return %arg0, %c0_i32 : i32, i32
  }
}

</mosaic_0001>

<llo_original>
// kernel: tpu_custom_call.1
$region0: #{tpu_custom_call.1}
  #allocation0 [shape = 'u32[]', space=smem, size = 0x4, offset = 0x4, fixed_abs, tag = 'smem constant byte address 0x4 - core index']
  #allocation1 [shape = 'u32[72,128]{1,0:T(1,128)}', space=vmem, size = 0x9000, scoped, tag = 'internal scratch']
  %s0 = inlined_call_operand.hbm [shape: f32[512,256], index: 0, kind: input, shape index: {}]
  %s1 = inlined_call_operand.hbm [shape: f32[512,256], index: 1, kind: output, shape index: {}]
  %s2 = sld [smem:[#allocation0]]
  $region18: #{tpu_custom_call.1} parent=0
    _
  %s4 = ssub.s32 1, %s2
  %s5 = scalar_select 0, %s4, %s2
  $region1: #{tpu_custom_call.1} parent=0
    #allocation2 [shape = 'u8[524288]{0}', space=vmem, size = 0x80000, scoped, tag = 'input window, operand 0, single buffered']
    #allocation3 [shape = 's32[1]{0}', space=sflag, size = 0x4, scoped, tag = 'scoped memory for tpu_custom_call.1']
    #allocation4 [shape = 's32[1]{0}', space=sflag, size = 0x4, scoped, tag = 'scoped memory for tpu_custom_call.1']
    #allocation5 [shape = 'u8[524288]{0}', space=vmem, size = 0x80000, scoped, tag = 'output window, operand 0, single buffered']
    %6 = vsyncpa [#allocation3], 0
    %7 = vsyncpa [#allocation4], 0
    // Predicated region
    $region2: #{tpu_custom_call.1} parent=1 // pred_check
      _
    $region3: #{tpu_custom_call.1} parent=1 // pred_check_branch
      %9 = sbr.rel (0) target = $region5
    $region4: #{tpu_custom_call.1} parent=1 // pred_region
      %11 = vsyncadd [#allocation3], 0
      %s12 = sshll.u32 %s0, 4
      %s13 = int_to_ptr.hbm [resolvable:$true] %s12
      %s14 = sshll.u32 [#allocation2], 4
      %s15 = int_to_ptr.vmem [resolvable:$true] %s14
      %20 = dma.hbm_to_vmem [thread:$0]  %s13, 16384, %s15, [#allocation3], 256, 256, 16
    $region5: #{tpu_custom_call.1} parent=1 // pred_fallthru
      _
    // Predicated region
    $region6: #{tpu_custom_call.1} parent=1 // pred_check
      _
    $region7: #{tpu_custom_call.1} parent=1 // pred_check_branch
      %22 = sbr.rel (0) target = $region9
    $region8: #{tpu_custom_call.1} parent=1 // pred_region
      %24 = dma.done [#allocation3], 16384
    $region9: #{tpu_custom_call.1} parent=1 // pred_fallthru
      _
    %v25 = vld [vmem:[#allocation2] sm:$0xff]
    %v26 = vld [vmem:[#allocation2 + $0x8] sm:$0xff]
    %v27 = vld [vmem:[#allocation2 + $0x10] sm:$0xff]
    %v28 = vld [vmem:[#allocation2 + $0x18] sm:$0xff]
    %v29 = vld [vmem:[#allocation2 + $0x20] sm:$0xff]
    %v30 = vld [vmem:[#allocation2 + $0x28] sm:$0xff]
    %v31 = vld [vmem:[#allocation2 + $0x30] sm:$0xff]
    %v32 = vld [vmem:[#allocation2 + $0x38] sm:$0xff]
    %v33 = vld [vmem:[#allocation2 + $0x40] sm:$0xff]
    %v34 = vld [vmem:[#allocation2 + $0x48] sm:$0xff]
    %v35 = vld [vmem:[#allocation2 + $0x50] sm:$0xff]
    %v36 = vld [vmem:[#allocation2 + $0x58] sm:$0xff]
    %v37 = vld [vmem:[#allocation2 + $0x60] sm:$0xff]
    %v38 = vld [vmem:[#allocation2 + $0x68] sm:$0xff]
    %v39 = vld [vmem:[#allocation2 + $0x70] sm:$0xff]
    %v40 = vld [vmem:[#allocation2 + $0x78] sm:$0xff]
    %v41 = vld [vmem:[#allocation2 + $0x80] sm:$0xff]
    %v42 = vld [vmem:[#allocation2 + $0x88] sm:$0xff]
    %v43 = vld [vmem:[#allocation2 + $0x90] sm:$0xff]
    %v44 = vld [vmem:[#allocation2 + $0x98] sm:$0xff]
    %v45 = vld [vmem:[#allocation2 + $0xa0] sm:$0xff]
    %v46 = vld [vmem:[#allocation2 + $0xa8] sm:$0xff]
    %v47 = vld [vmem:[#allocation2 + $0xb0] sm:$0xff]
    %v48 = vld [vmem:[#allocation2 + $0xb8] sm:$0xff]
    %v49 = vld [vmem:[#allocation2 + $0xc0] sm:$0xff]
    %v50 = vld [vmem:[#allocation2 + $0xc8] sm:$0xff]
    %v51 = vld [vmem:[#allocation2 + $0xd0] sm:$0xff]
    %v52 = vld [vmem:[#allocation2 + $0xd8] sm:$0xff]
    %v53 = vld [vmem:[#allocation2 + $0xe0] sm:$0xff]
    %v54 = vld [vmem:[#allocation2 + $0xe8] sm:$0xff]
    %v55 = vld [vmem:[#allocation2 + $0xf0] sm:$0xff]
    %v56 = vld [vmem:[#allocation2 + $0xf8] sm:$0xff]
    %v57 = vld [vmem:[#allocation2 + $0x100] sm:$0xff]
    %v58 = vld [vmem:[#allocation2 + $0x108] sm:$0xff]
    %v59 = vld [vmem:[#allocation2 + $0x110] sm:$0xff]
    %v60 = vld [vmem:[#allocation2 + $0x118] sm:$0xff]
    %v61 = vld [vmem:[#allocation2 + $0x120] sm:$0xff]
    %v62 = vld [vmem:[#allocation2 + $0x128] sm:$0xff]
    %v63 = vld [vmem:[#allocation2 + $0x130] sm:$0xff]
    %v64 = vld [vmem:[#allocation2 + $0x138] sm:$0xff]
    %v65 = vld [vmem:[#allocation2 + $0x140] sm:$0xff]
    %v66 = vld [vmem:[#allocation2 + $0x148] sm:$0xff]
    %v67 = vld [vmem:[#allocation2 + $0x150] sm:$0xff]
    %v68 = vld [vmem:[#allocation2 + $0x158] sm:$0xff]
    %v69 = vld [vmem:[#allocation2 + $0x160] sm:$0xff]
    %v70 = vld [vmem:[#allocation2 + $0x168] sm:$0xff]
    %v71 = vld [vmem:[#allocation2 + $0x170] sm:$0xff]
    %v72 = vld [vmem:[#allocation2 + $0x178] sm:$0xff]
    %v73 = vld [vmem:[#allocation2 + $0x180] sm:$0xff]
    %v74 = vld [vmem:[#allocation2 + $0x188] sm:$0xff]
    %v75 = vld [vmem:[#allocation2 + $0x190] sm:$0xff]
    %v76 = vld [vmem:[#allocation2 + $0x198] sm:$0xff]
    %v77 = vld [vmem:[#allocation2 + $0x1a0] sm:$0xff]
    %v78 = vld [vmem:[#allocation2 + $0x1a8] sm:$0xff]
    %v79 = vld [vmem:[#allocation2 + $0x1b0] sm:$0xff]
    %v80 = vld [vmem:[#allocation2 + $0x1b8] sm:$0xff]
    %v81 = vld [vmem:[#allocation2 + $0x1c0] sm:$0xff]
    %v82 = vld [vmem:[#allocation2 + $0x1c8] sm:$0xff]
    %v83 = vld [vmem:[#allocation2 + $0x1d0] sm:$0xff]
    %v84 = vld [vmem:[#allocation2 + $0x1d8] sm:$0xff]
    %v85 = vld [vmem:[#allocation2 + $0x1e0] sm:$0xff]
    %v86 = vld [vmem:[#allocation2 + $0x1e8] sm:$0xff]
    %v87 = vld [vmem:[#allocation2 + $0x1f0] sm:$0xff]
    %v88 = vld [vmem:[#allocation2 + $0x1f8] sm:$0xff]
    %v89 = vld [vmem:[#allocation2 + $0x200] sm:$0xff]
    %v90 = vld [vmem:[#allocation2 + $0x208] sm:$0xff]
    %v91 = vld [vmem:[#allocation2 + $0x210] sm:$0xff]
    %v92 = vld [vmem:[#allocation2 + $0x218] sm:$0xff]
    %v93 = vld [vmem:[#allocation2 + $0x220] sm:$0xff]
    %v94 = vld [vmem:[#allocation2 + $0x228] sm:$0xff]
    %v95 = vld [vmem:[#allocation2 + $0x230] sm:$0xff]
    %v96 = vld [vmem:[#allocation2 + $0x238] sm:$0xff]
    %v97 = vld [vmem:[#allocation2 + $0x240] sm:$0xff]
    %v98 = vld [vmem:[#allocation2 + $0x248] sm:$0xff]
    %v99 = vld [vmem:[#allocation2 + $0x250] sm:$0xff]
    %v100 = vld [vmem:[#allocation2 + $0x258] sm:$0xff]
    %v101 = vld [vmem:[#allocation2 + $0x260] sm:$0xff]
    %v102 = vld [vmem:[#allocation2 + $0x268] sm:$0xff]
    %v103 = vld [vmem:[#allocation2 + $0x270] sm:$0xff]
    %v104 = vld [vmem:[#allocation2 + $0x278] sm:$0xff]
    %v105 = vld [vmem:[#allocation2 + $0x280] sm:$0xff]
    %v106 = vld [vmem:[#allocation2 + $0x288] sm:$0xff]
    %v107 = vld [vmem:[#allocation2 + $0x290] sm:$0xff]
    %v108 = vld [vmem:[#allocation2 + $0x298] sm:$0xff]
    %v109 = vld [vmem:[#allocation2 + $0x2a0] sm:$0xff]
    %v110 = vld [vmem:[#allocation2 + $0x2a8] sm:$0xff]
    %v111 = vld [vmem:[#allocation2 + $0x2b0] sm:$0xff]
    %v112 = vld [vmem:[#allocation2 + $0x2b8] sm:$0xff]
    %v113 = vld [vmem:[#allocation2 + $0x2c0] sm:$0xff]
    %v114 = vld [vmem:[#allocation2 + $0x2c8] sm:$0xff]
    %v115 = vld [vmem:[#allocation2 + $0x2d0] sm:$0xff]
    %v116 = vld [vmem:[#allocation2 + $0x2d8] sm:$0xff]
    %v117 = vld [vmem:[#allocation2 + $0x2e0] sm:$0xff]
    %v118 = vld [vmem:[#allocation2 + $0x2e8] sm:$0xff]
    %v119 = vld [vmem:[#allocation2 + $0x2f0] sm:$0xff]
    %v120 = vld [vmem:[#allocation2 + $0x2f8] sm:$0xff]
    %v121 = vld [vmem:[#allocation2 + $0x300] sm:$0xff]
    %v122 = vld [vmem:[#allocation2 + $0x308] sm:$0xff]
    %v123 = vld [vmem:[#allocation2 + $0x310] sm:$0xff]
    %v124 = vld [vmem:[#allocation2 + $0x318] sm:$0xff]
    %v125 = vld [vmem:[#allocation2 + $0x320] sm:$0xff]
    %v126 = vld [vmem:[#allocation2 + $0x328] sm:$0xff]
    %v127 = vld [vmem:[#allocation2 + $0x330] sm:$0xff]
    %v128 = vld [vmem:[#allocation2 + $0x338] sm:$0xff]
    %v129 = vld [vmem:[#allocation2 + $0x340] sm:$0xff]
    %v130 = vld [vmem:[#allocation2 + $0x348] sm:$0xff]
    %v131 = vld [vmem:[#allocation2 + $0x350] sm:$0xff]
    %v132 = vld [vmem:[#allocation2 + $0x358] sm:$0xff]
    %v133 = vld [vmem:[#allocation2 + $0x360] sm:$0xff]
    %v134 = vld [vmem:[#allocation2 + $0x368] sm:$0xff]
    %v135 = vld [vmem:[#allocation2 + $0x370] sm:$0xff]
    %v136 = vld [vmem:[#allocation2 + $0x378] sm:$0xff]
    %v137 = vld [vmem:[#allocation2 + $0x380] sm:$0xff]
    %v138 = vld [vmem:[#allocation2 + $0x388] sm:$0xff]
    %v139 = vld [vmem:[#allocation2 + $0x390] sm:$0xff]
    %v140 = vld [vmem:[#allocation2 + $0x398] sm:$0xff]
    %v141 = vld [vmem:[#allocation2 + $0x3a0] sm:$0xff]
    %v142 = vld [vmem:[#allocation2 + $0x3a8] sm:$0xff]
    %v143 = vld [vmem:[#allocation2 + $0x3b0] sm:$0xff]
    %v144 = vld [vmem:[#allocation2 + $0x3b8] sm:$0xff]
    %v145 = vld [vmem:[#allocation2 + $0x3c0] sm:$0xff]
    %v146 = vld [vmem:[#allocation2 + $0x3c8] sm:$0xff]
    %v147 = vld [vmem:[#allocation2 + $0x3d0] sm:$0xff]
    %v148 = vld [vmem:[#allocation2 + $0x3d8] sm:$0xff]
    %v149 = vld [vmem:[#allocation2 + $0x3e0] sm:$0xff]
    %v150 = vld [vmem:[#allocation2 + $0x3e8] sm:$0xff]
    %v151 = vld [vmem:[#allocation2 + $0x3f0] sm:$0xff]
    %v152 = vld [vmem:[#allocation2 + $0x3f8] sm:$0xff]
    %v153 = vmul.f32 %v25, %v25
    %v154 = vmul.f32 %v26, %v26
    %v155 = vmul.f32 %v27, %v27
    %v156 = vmul.f32 %v28, %v28
    %v157 = vmul.f32 %v29, %v29
    %v158 = vmul.f32 %v30, %v30
    %v159 = vmul.f32 %v31, %v31
    %v160 = vmul.f32 %v32, %v32
    %v161 = vmul.f32 %v33, %v33
    %v162 = vmul.f32 %v34, %v34
    %v163 = vmul.f32 %v35, %v35
    %v164 = vmul.f32 %v36, %v36
    %v165 = vmul.f32 %v37, %v37
    %v166 = vmul.f32 %v38, %v38
    %v167 = vmul.f32 %v39, %v39
    %v168 = vmul.f32 %v40, %v40
    %v169 = vmul.f32 %v41, %v41
    %v170 = vmul.f32 %v42, %v42
    %v171 = vmul.f32 %v43, %v43
    %v172 = vmul.f32 %v44, %v44
    %v173 = vmul.f32 %v45, %v45
    %v174 = vmul.f32 %v46, %v46
    %v175 = vmul.f32 %v47, %v47
    %v176 = vmul.f32 %v48, %v48
    %v177 = vmul.f32 %v49, %v49
    %v178 = vmul.f32 %v50, %v50
    %v179 = vmul.f32 %v51, %v51
    %v180 = vmul.f32 %v52, %v52
    %v181 = vmul.f32 %v53, %v53
    %v182 = vmul.f32 %v54, %v54
    %v183 = vmul.f32 %v55, %v55
    %v184 = vmul.f32 %v56, %v56
    %v185 = vmul.f32 %v57, %v57
    %v186 = vmul.f32 %v58, %v58
    %v187 = vmul.f32 %v59, %v59
    %v188 = vmul.f32 %v60, %v60
    %v189 = vmul.f32 %v61, %v61
    %v190 = vmul.f32 %v62, %v62
    %v191 = vmul.f32 %v63, %v63
    %v192 = vmul.f32 %v64, %v64
    %v193 = vmul.f32 %v65, %v65
    %v194 = vmul.f32 %v66, %v66
    %v195 = vmul.f32 %v67, %v67
    %v196 = vmul.f32 %v68, %v68
    %v197 = vmul.f32 %v69, %v69
    %v198 = vmul.f32 %v70, %v70
    %v199 = vmul.f32 %v71, %v71
    %v200 = vmul.f32 %v72, %v72
    %v201 = vmul.f32 %v73, %v73
    %v202 = vmul.f32 %v74, %v74
    %v203 = vmul.f32 %v75, %v75
    %v204 = vmul.f32 %v76, %v76
    %v205 = vmul.f32 %v77, %v77
    %v206 = vmul.f32 %v78, %v78
    %v207 = vmul.f32 %v79, %v79
    %v208 = vmul.f32 %v80, %v80
    %v209 = vmul.f32 %v81, %v81
    %v210 = vmul.f32 %v82, %v82
    %v211 = vmul.f32 %v83, %v83
    %v212 = vmul.f32 %v84, %v84
    %v213 = vmul.f32 %v85, %v85
    %v214 = vmul.f32 %v86, %v86
    %v215 = vmul.f32 %v87, %v87
    %v216 = vmul.f32 %v88, %v88
    %v217 = vmul.f32 %v89, %v89
    %v218 = vmul.f32 %v90, %v90
    %v219 = vmul.f32 %v91, %v91
    %v220 = vmul.f32 %v92, %v92
    %v221 = vmul.f32 %v93, %v93
    %v222 = vmul.f32 %v94, %v94
    %v223 = vmul.f32 %v95, %v95
    %v224 = vmul.f32 %v96, %v96
    %v225 = vmul.f32 %v97, %v97
    %v226 = vmul.f32 %v98, %v98
    %v227 = vmul.f32 %v99, %v99
    %v228 = vmul.f32 %v100, %v100
    %v229 = vmul.f32 %v101, %v101
    %v230 = vmul.f32 %v102, %v102
    %v231 = vmul.f32 %v103, %v103
    %v232 = vmul.f32 %v104, %v104
    %v233 = vmul.f32 %v105, %v105
    %v234 = vmul.f32 %v106, %v106
    %v235 = vmul.f32 %v107, %v107
    %v236 = vmul.f32 %v108, %v108
    %v237 = vmul.f32 %v109, %v109
    %v238 = vmul.f32 %v110, %v110
    %v239 = vmul.f32 %v111, %v111
    %v240 = vmul.f32 %v112, %v112
    %v241 = vmul.f32 %v113, %v113
    %v242 = vmul.f32 %v114, %v114
    %v243 = vmul.f32 %v115, %v115
    %v244 = vmul.f32 %v116, %v116
    %v245 = vmul.f32 %v117, %v117
    %v246 = vmul.f32 %v118, %v118
    %v247 = vmul.f32 %v119, %v119
    %v248 = vmul.f32 %v120, %v120
    %v249 = vmul.f32 %v121, %v121
    %v250 = vmul.f32 %v122, %v122
    %v251 = vmul.f32 %v123, %v123
    %v252 = vmul.f32 %v124, %v124
    %v253 = vmul.f32 %v125, %v125
    %v254 = vmul.f32 %v126, %v126
    %v255 = vmul.f32 %v127, %v127
    %v256 = vmul.f32 %v128, %v128
    %v257 = vmul.f32 %v129, %v129
    %v258 = vmul.f32 %v130, %v130
    %v259 = vmul.f32 %v131, %v131
    %v260 = vmul.f32 %v132, %v132
    %v261 = vmul.f32 %v133, %v133
    %v262 = vmul.f32 %v134, %v134
    %v263 = vmul.f32 %v135, %v135
    %v264 = vmul.f32 %v136, %v136
    %v265 = vmul.f32 %v137, %v137
    %v266 = vmul.f32 %v138, %v138
    %v267 = vmul.f32 %v139, %v139
    %v268 = vmul.f32 %v140, %v140
    %v269 = vmul.f32 %v141, %v141
    %v270 = vmul.f32 %v142, %v142
    %v271 = vmul.f32 %v143, %v143
    %v272 = vmul.f32 %v144, %v144
    %v273 = vmul.f32 %v145, %v145
    %v274 = vmul.f32 %v146, %v146
    %v275 = vmul.f32 %v147, %v147
    %v276 = vmul.f32 %v148, %v148
    %v277 = vmul.f32 %v149, %v149
    %v278 = vmul.f32 %v150, %v150
    %v279 = vmul.f32 %v151, %v151
    %v280 = vmul.f32 %v152, %v152
    %v281 = vadd.f32 %v153, %v154
    %282 = vadd.xlane.f32.xlu0 %v281
    %v283 = vpop.xlane.xlu0 %282
    %v284 = vadd.f32 %v155, %v156
    %285 = vadd.xlane.f32.xlu0 %v284
    %v286 = vpop.xlane.xlu0 %285
    %v287 = vadd.f32 %v157, %v158
    %288 = vadd.xlane.f32.xlu0 %v287
    %v289 = vpop.xlane.xlu0 %288
    %v290 = vadd.f32 %v159, %v160
    %291 = vadd.xlane.f32.xlu0 %v290
    %v292 = vpop.xlane.xlu0 %291
    %v293 = vadd.f32 %v161, %v162
    %294 = vadd.xlane.f32.xlu0 %v293
    %v295 = vpop.xlane.xlu0 %294
    %v296 = vadd.f32 %v163, %v164
    %297 = vadd.xlane.f32.xlu0 %v296
    %v298 = vpop.xlane.xlu0 %297
    %v299 = vadd.f32 %v165, %v166
    %300 = vadd.xlane.f32.xlu0 %v299
    %v301 = vpop.xlane.xlu0 %300
    %v302 = vadd.f32 %v167, %v168
    %303 = vadd.xlane.f32.xlu0 %v302
    %v304 = vpop.xlane.xlu0 %303
    %v305 = vadd.f32 %v169, %v170
    %306 = vadd.xlane.f32.xlu0 %v305
    %v307 = vpop.xlane.xlu0 %306
    %v308 = vadd.f32 %v171, %v172
    %309 = vadd.xlane.f32.xlu0 %v308
    %v310 = vpop.xlane.xlu0 %309
    %v311 = vadd.f32 %v173, %v174
    %312 = vadd.xlane.f32.xlu0 %v311
    %v313 = vpop.xlane.xlu0 %312
    %v314 = vadd.f32 %v175, %v176
    %315 = vadd.xlane.f32.xlu0 %v314
    %v316 = vpop.xlane.xlu0 %315
    %v317 = vadd.f32 %v177, %v178
    %318 = vadd.xlane.f32.xlu0 %v317
    %v319 = vpop.xlane.xlu0 %318
    %v320 = vadd.f32 %v179, %v180
    %321 = vadd.xlane.f32.xlu0 %v320
    %v322 = vpop.xlane.xlu0 %321
    %v323 = vadd.f32 %v181, %v182
    %324 = vadd.xlane.f32.xlu0 %v323
    %v325 = vpop.xlane.xlu0 %324
    %v326 = vadd.f32 %v183, %v184
    %327 = vadd.xlane.f32.xlu0 %v326
    %v328 = vpop.xlane.xlu0 %327
    %v329 = vadd.f32 %v185, %v186
    %330 = vadd.xlane.f32.xlu0 %v329
    %v331 = vpop.xlane.xlu0 %330
    %v332 = vadd.f32 %v187, %v188
    %333 = vadd.xlane.f32.xlu0 %v332
    %v334 = vpop.xlane.xlu0 %333
    %v335 = vadd.f32 %v189, %v190
    %336 = vadd.xlane.f32.xlu0 %v335
    %v337 = vpop.xlane.xlu0 %336
    %v338 = vadd.f32 %v191, %v192
    %339 = vadd.xlane.f32.xlu0 %v338
    %v340 = vpop.xlane.xlu0 %339
    %v341 = vadd.f32 %v193, %v194
    %342 = vadd.xlane.f32.xlu0 %v341
    %v343 = vpop.xlane.xlu0 %342
    %v344 = vadd.f32 %v195, %v196
    %345 = vadd.xlane.f32.xlu0 %v344
    %v346 = vpop.xlane.xlu0 %345
    %v347 = vadd.f32 %v197, %v198
    %348 = vadd.xlane.f32.xlu0 %v347
    %v349 = vpop.xlane.xlu0 %348
    %v350 = vadd.f32 %v199, %v200
    %351 = vadd.xlane.f32.xlu0 %v350
    %v352 = vpop.xlane.xlu0 %351
    %v353 = vadd.f32 %v201, %v202
    %354 = vadd.xlane.f32.xlu0 %v353
    %v355 = vpop.xlane.xlu0 %354
    %v356 = vadd.f32 %v203, %v204
    %357 = vadd.xlane.f32.xlu0 %v356
    %v358 = vpop.xlane.xlu0 %357
    %v359 = vadd.f32 %v205, %v206
    %360 = vadd.xlane.f32.xlu0 %v359
    %v361 = vpop.xlane.xlu0 %360
    %v362 = vadd.f32 %v207, %v208
    %363 = vadd.xlane.f32.xlu0 %v362
    %v364 = vpop.xlane.xlu0 %363
    %v365 = vadd.f32 %v209, %v210
    %366 = vadd.xlane.f32.xlu0 %v365
    %v367 = vpop.xlane.xlu0 %366
    %v368 = vadd.f32 %v211, %v212
    %369 = vadd.xlane.f32.xlu0 %v368
    %v370 = vpop.xlane.xlu0 %369
    %v371 = vadd.f32 %v213, %v214
    %372 = vadd.xlane.f32.xlu0 %v371
    %v373 = vpop.xlane.xlu0 %372
    %v374 = vadd.f32 %v215, %v216
    %375 = vadd.xlane.f32.xlu0 %v374
    %v376 = vpop.xlane.xlu0 %375
    %v377 = vadd.f32 %v217, %v218
    %378 = vadd.xlane.f32.xlu0 %v377
    %v379 = vpop.xlane.xlu0 %378
    %v380 = vadd.f32 %v219, %v220
    %381 = vadd.xlane.f32.xlu0 %v380
    %v382 = vpop.xlane.xlu0 %381
    %v383 = vadd.f32 %v221, %v222
    %384 = vadd.xlane.f32.xlu0 %v383
    %v385 = vpop.xlane.xlu0 %384
    %v386 = vadd.f32 %v223, %v224
    %387 = vadd.xlane.f32.xlu0 %v386
    %v388 = vpop.xlane.xlu0 %387
    %v389 = vadd.f32 %v225, %v226
    %390 = vadd.xlane.f32.xlu0 %v389
    %v391 = vpop.xlane.xlu0 %390
    %v392 = vadd.f32 %v227, %v228
    %393 = vadd.xlane.f32.xlu0 %v392
    %v394 = vpop.xlane.xlu0 %393
    %v395 = vadd.f32 %v229, %v230
    %396 = vadd.xlane.f32.xlu0 %v395
    %v397 = vpop.xlane.xlu0 %396
    %v398 = vadd.f32 %v231, %v232
    %399 = vadd.xlane.f32.xlu0 %v398
    %v400 = vpop.xlane.xlu0 %399
    %v401 = vadd.f32 %v233, %v234
    %402 = vadd.xlane.f32.xlu0 %v401
    %v403 = vpop.xlane.xlu0 %402
    %v404 = vadd.f32 %v235, %v236
    %405 = vadd.xlane.f32.xlu0 %v404
    %v406 = vpop.xlane.xlu0 %405
    %v407 = vadd.f32 %v237, %v238
    %408 = vadd.xlane.f32.xlu0 %v407
    %v409 = vpop.xlane.xlu0 %408
    %v410 = vadd.f32 %v239, %v240
    %411 = vadd.xlane.f32.xlu0 %v410
    %v412 = vpop.xlane.xlu0 %411
    %v413 = vadd.f32 %v241, %v242
    %414 = vadd.xlane.f32.xlu0 %v413
    %v415 = vpop.xlane.xlu0 %414
    %v416 = vadd.f32 %v243, %v244
    %417 = vadd.xlane.f32.xlu0 %v416
    %v418 = vpop.xlane.xlu0 %417
    %v419 = vadd.f32 %v245, %v246
    %420 = vadd.xlane.f32.xlu0 %v419
    %v421 = vpop.xlane.xlu0 %420
    %v422 = vadd.f32 %v247, %v248
    %423 = vadd.xlane.f32.xlu0 %v422
    %v424 = vpop.xlane.xlu0 %423
    %v425 = vadd.f32 %v249, %v250
    %426 = vadd.xlane.f32.xlu0 %v425
    %v427 = vpop.xlane.xlu0 %426
    %v428 = vadd.f32 %v251, %v252
    %429 = vadd.xlane.f32.xlu0 %v428
    %v430 = vpop.xlane.xlu0 %429
    %v431 = vadd.f32 %v253, %v254
    %432 = vadd.xlane.f32.xlu0 %v431
    %v433 = vpop.xlane.xlu0 %432
    %v434 = vadd.f32 %v255, %v256
    %435 = vadd.xlane.f32.xlu0 %v434
    %v436 = vpop.xlane.xlu0 %435
    %v437 = vadd.f32 %v257, %v258
    %438 = vadd.xlane.f32.xlu0 %v437
    %v439 = vpop.xlane.xlu0 %438
    %v440 = vadd.f32 %v259, %v260
    %441 = vadd.xlane.f32.xlu0 %v440
    %v442 = vpop.xlane.xlu0 %441
    %v443 = vadd.f32 %v261, %v262
    %444 = vadd.xlane.f32.xlu0 %v443
    %v445 = vpop.xlane.xlu0 %444
    %v446 = vadd.f32 %v263, %v264
    %447 = vadd.xlane.f32.xlu0 %v446
    %v448 = vpop.xlane.xlu0 %447
    %v449 = vadd.f32 %v265, %v266
    %450 = vadd.xlane.f32.xlu0 %v449
    %v451 = vpop.xlane.xlu0 %450
    %v452 = vadd.f32 %v267, %v268
    %453 = vadd.xlane.f32.xlu0 %v452
    %v454 = vpop.xlane.xlu0 %453
    %v455 = vadd.f32 %v269, %v270
    %456 = vadd.xlane.f32.xlu0 %v455
    %v457 = vpop.xlane.xlu0 %456
    %v458 = vadd.f32 %v271, %v272
    %459 = vadd.xlane.f32.xlu0 %v458
    %v460 = vpop.xlane.xlu0 %459
    %v461 = vadd.f32 %v273, %v274
    %462 = vadd.xlane.f32.xlu0 %v461
    %v463 = vpop.xlane.xlu0 %462
    %v464 = vadd.f32 %v275, %v276
    %465 = vadd.xlane.f32.xlu0 %v464
    %v466 = vpop.xlane.xlu0 %465
    %v467 = vadd.f32 %v277, %v278
    %468 = vadd.xlane.f32.xlu0 %v467
    %v469 = vpop.xlane.xlu0 %468
    %v470 = vadd.f32 %v279, %v280
    %471 = vadd.xlane.f32.xlu0 %v470
    %v472 = vpop.xlane.xlu0 %471
    %v473 = vrsqrt.pop %v283
    %v474 = vmul.f32 %v473, %v283
    %v475 = vmul.f32 %v474, %v473
    %v476 = vmul.f32 0.5, %v475
    %v477 = vsub.f32 1.5, %v476
    %v478 = vmul.f32 %v473, %v477
    %vm479 = vweird.f32 %v283
    %vm480 = vweird.f32 %v473
    %vm481 = vmor %vm479, %vm480
    %v482 = vsel %vm481, %v473, %v478
    %v483 = vrsqrt.pop %v286
    %v484 = vmul.f32 %v483, %v286
    %v485 = vmul.f32 %v484, %v483
    %v486 = vmul.f32 0.5, %v485
    %v487 = vsub.f32 1.5, %v486
    %v488 = vmul.f32 %v483, %v487
    %vm489 = vweird.f32 %v286
    %vm490 = vweird.f32 %v483
    %vm491 = vmor %vm489, %vm490
    %v492 = vsel %vm491, %v483, %v488
    %v493 = vrsqrt.pop %v289
    %v494 = vmul.f32 %v493, %v289
    %v495 = vmul.f32 %v494, %v493
    %v496 = vmul.f32 0.5, %v495
    %v497 = vsub.f32 1.5, %v496
    %v498 = vmul.f32 %v493, %v497
    %vm499 = vweird.f32 %v289
    %vm500 = vweird.f32 %v493
    %vm501 = vmor %vm499, %vm500
    %v502 = vsel %vm501, %v493, %v498
    %v503 = vrsqrt.pop %v292
    %v504 = vmul.f32 %v503, %v292
    %v505 = vmul.f32 %v504, %v503
    %v506 = vmul.f32 0.5, %v505
    %v507 = vsub.f32 1.5, %v506
    %v508 = vmul.f32 %v503, %v507
    %vm509 = vweird.f32 %v292
    %vm510 = vweird.f32 %v503
    %vm511 = vmor %vm509, %vm510
    %v512 = vsel %vm511, %v503, %v508
    %v513 = vrsqrt.pop %v295
    %v514 = vmul.f32 %v513, %v295
    %v515 = vmul.f32 %v514, %v513
    %v516 = vmul.f32 0.5, %v515
    %v517 = vsub.f32 1.5, %v516
    %v518 = vmul.f32 %v513, %v517
    %vm519 = vweird.f32 %v295
    %vm520 = vweird.f32 %v513
    %vm521 = vmor %vm519, %vm520
    %v522 = vsel %vm521, %v513, %v518
    %v523 = vrsqrt.pop %v298
    %v524 = vmul.f32 %v523, %v298
    %v525 = vmul.f32 %v524, %v523
    %v526 = vmul.f32 0.5, %v525
    %v527 = vsub.f32 1.5, %v526
    %v528 = vmul.f32 %v523, %v527
    %vm529 = vweird.f32 %v298
    %vm530 = vweird.f32 %v523
    %vm531 = vmor %vm529, %vm530
    %v532 = vsel %vm531, %v523, %v528
    %v533 = vrsqrt.pop %v301
    %v534 = vmul.f32 %v533, %v301
    %v535 = vmul.f32 %v534, %v533
    %v536 = vmul.f32 0.5, %v535
    %v537 = vsub.f32 1.5, %v536
    %v538 = vmul.f32 %v533, %v537
    %vm539 = vweird.f32 %v301
    %vm540 = vweird.f32 %v533
    %vm541 = vmor %vm539, %vm540
    %v542 = vsel %vm541, %v533, %v538
    %v543 = vrsqrt.pop %v304
    %v544 = vmul.f32 %v543, %v304
    %v545 = vmul.f32 %v544, %v543
    %v546 = vmul.f32 0.5, %v545
    %v547 = vsub.f32 1.5, %v546
    %v548 = vmul.f32 %v543, %v547
    %vm549 = vweird.f32 %v304
    %vm550 = vweird.f32 %v543
    %vm551 = vmor %vm549, %vm550
    %v552 = vsel %vm551, %v543, %v548
    %v553 = vrsqrt.pop %v307
    %v554 = vmul.f32 %v553, %v307
    %v555 = vmul.f32 %v554, %v553
    %v556 = vmul.f32 0.5, %v555
    %v557 = vsub.f32 1.5, %v556
    %v558 = vmul.f32 %v553, %v557
    %vm559 = vweird.f32 %v307
    %vm560 = vweird.f32 %v553
    %vm561 = vmor %vm559, %vm560
    %v562 = vsel %vm561, %v553, %v558
    %v563 = vrsqrt.pop %v310
    %v564 = vmul.f32 %v563, %v310
    %v565 = vmul.f32 %v564, %v563
    %v566 = vmul.f32 0.5, %v565
    %v567 = vsub.f32 1.5, %v566
    %v568 = vmul.f32 %v563, %v567
    %vm569 = vweird.f32 %v310
    %vm570 = vweird.f32 %v563
    %vm571 = vmor %vm569, %vm570
    %v572 = vsel %vm571, %v563, %v568
    %v573 = vrsqrt.pop %v313
    %v574 = vmul.f32 %v573, %v313
    %v575 = vmul.f32 %v574, %v573
    %v576 = vmul.f32 0.5, %v575
    %v577 = vsub.f32 1.5, %v576
    %v578 = vmul.f32 %v573, %v577
    %vm579 = vweird.f32 %v313
    %vm580 = vweird.f32 %v573
    %vm581 = vmor %vm579, %vm580
    %v582 = vsel %vm581, %v573, %v578
    %v583 = vrsqrt.pop %v316
    %v584 = vmul.f32 %v583, %v316
    %v585 = vmul.f32 %v584, %v583
    %v586 = vmul.f32 0.5, %v585
    %v587 = vsub.f32 1.5, %v586
    %v588 = vmul.f32 %v583, %v587
    %vm589 = vweird.f32 %v316
    %vm590 = vweird.f32 %v583
    %vm591 = vmor %vm589, %vm590
    %v592 = vsel %vm591, %v583, %v588
    %v593 = vrsqrt.pop %v319
    %v594 = vmul.f32 %v593, %v319
    %v595 = vmul.f32 %v594, %v593
    %v596 = vmul.f32 0.5, %v595
    %v597 = vsub.f32 1.5, %v596
    %v598 = vmul.f32 %v593, %v597
    %vm599 = vweird.f32 %v319
    %vm600 = vweird.f32 %v593
    %vm601 = vmor %vm599, %vm600
    %v602 = vsel %vm601, %v593, %v598
    %v603 = vrsqrt.pop %v322
    %v604 = vmul.f32 %v603, %v322
    %v605 = vmul.f32 %v604, %v603
    %v606 = vmul.f32 0.5, %v605
    %v607 = vsub.f32 1.5, %v606
    %v608 = vmul.f32 %v603, %v607
    %vm609 = vweird.f32 %v322
    %vm610 = vweird.f32 %v603
    %vm611 = vmor %vm609, %vm610
    %v612 = vsel %vm611, %v603, %v608
    %v613 = vrsqrt.pop %v325
    %v614 = vmul.f32 %v613, %v325
    %v615 = vmul.f32 %v614, %v613
    %v616 = vmul.f32 0.5, %v615
    %v617 = vsub.f32 1.5, %v616
    %v618 = vmul.f32 %v613, %v617
    %vm619 = vweird.f32 %v325
    %vm620 = vweird.f32 %v613
    %vm621 = vmor %vm619, %vm620
    %v622 = vsel %vm621, %v613, %v618
    %v623 = vrsqrt.pop %v328
    %v624 = vmul.f32 %v623, %v328
    %v625 = vmul.f32 %v624, %v623
    %v626 = vmul.f32 0.5, %v625
    %v627 = vsub.f32 1.5, %v626
    %v628 = vmul.f32 %v623, %v627
    %vm629 = vweird.f32 %v328
    %vm630 = vweird.f32 %v623
    %vm631 = vmor %vm629, %vm630
    %v632 = vsel %vm631, %v623, %v628
    %v633 = vrsqrt.pop %v331
    %v634 = vmul.f32 %v633, %v331
    %v635 = vmul.f32 %v634, %v633
    %v636 = vmul.f32 0.5, %v635
    %v637 = vsub.f32 1.5, %v636
    %v638 = vmul.f32 %v633, %v637
    %vm639 = vweird.f32 %v331
    %vm640 = vweird.f32 %v633
    %vm641 = vmor %vm639, %vm640
    %v642 = vsel %vm641, %v633, %v638
    %v643 = vrsqrt.pop %v334
    %v644 = vmul.f32 %v643, %v334
    %v645 = vmul.f32 %v644, %v643
    %v646 = vmul.f32 0.5, %v645
    %v647 = vsub.f32 1.5, %v646
    %v648 = vmul.f32 %v643, %v647
    %vm649 = vweird.f32 %v334
    %vm650 = vweird.f32 %v643
    %vm651 = vmor %vm649, %vm650
    %v652 = vsel %vm651, %v643, %v648
    %v653 = vrsqrt.pop %v337
    %v654 = vmul.f32 %v653, %v337
    %v655 = vmul.f32 %v654, %v653
    %v656 = vmul.f32 0.5, %v655
    %v657 = vsub.f32 1.5, %v656
    %v658 = vmul.f32 %v653, %v657
    %vm659 = vweird.f32 %v337
    %vm660 = vweird.f32 %v653
    %vm661 = vmor %vm659, %vm660
    %v662 = vsel %vm661, %v653, %v658
    %v663 = vrsqrt.pop %v340
    %v664 = vmul.f32 %v663, %v340
    %v665 = vmul.f32 %v664, %v663
    %v666 = vmul.f32 0.5, %v665
    %v667 = vsub.f32 1.5, %v666
    %v668 = vmul.f32 %v663, %v667
    %vm669 = vweird.f32 %v340
    %vm670 = vweird.f32 %v663
    %vm671 = vmor %vm669, %vm670
    %v672 = vsel %vm671, %v663, %v668
    %v673 = vrsqrt.pop %v343
    %v674 = vmul.f32 %v673, %v343
    %v675 = vmul.f32 %v674, %v673
    %v676 = vmul.f32 0.5, %v675
    %v677 = vsub.f32 1.5, %v676
    %v678 = vmul.f32 %v673, %v677
    %vm679 = vweird.f32 %v343
    %vm680 = vweird.f32 %v673
    %vm681 = vmor %vm679, %vm680
    %v682 = vsel %vm681, %v673, %v678
    %v683 = vrsqrt.pop %v346
    %v684 = vmul.f32 %v683, %v346
    %v685 = vmul.f32 %v684, %v683
    %v686 = vmul.f32 0.5, %v685
    %v687 = vsub.f32 1.5, %v686
    %v688 = vmul.f32 %v683, %v687
    %vm689 = vweird.f32 %v346
    %vm690 = vweird.f32 %v683
    %vm691 = vmor %vm689, %vm690
    %v692 = vsel %vm691, %v683, %v688
    %v693 = vrsqrt.pop %v349
    %v694 = vmul.f32 %v693, %v349
    %v695 = vmul.f32 %v694, %v693
    %v696 = vmul.f32 0.5, %v695
    %v697 = vsub.f32 1.5, %v696
    %v698 = vmul.f32 %v693, %v697
    %vm699 = vweird.f32 %v349
    %vm700 = vweird.f32 %v693
    %vm701 = vmor %vm699, %vm700
    %v702 = vsel %vm701, %v693, %v698
    %v703 = vrsqrt.pop %v352
    %v704 = vmul.f32 %v703, %v352
    %v705 = vmul.f32 %v704, %v703
    %v706 = vmul.f32 0.5, %v705
    %v707 = vsub.f32 1.5, %v706
    %v708 = vmul.f32 %v703, %v707
    %vm709 = vweird.f32 %v352
    %vm710 = vweird.f32 %v703
    %vm711 = vmor %vm709, %vm710
    %v712 = vsel %vm711, %v703, %v708
    %v713 = vrsqrt.pop %v355
    %v714 = vmul.f32 %v713, %v355
    %v715 = vmul.f32 %v714, %v713
    %v716 = vmul.f32 0.5, %v715
    %v717 = vsub.f32 1.5, %v716
    %v718 = vmul.f32 %v713, %v717
    %vm719 = vweird.f32 %v355
    %vm720 = vweird.f32 %v713
    %vm721 = vmor %vm719, %vm720
    %v722 = vsel %vm721, %v713, %v718
    %v723 = vrsqrt.pop %v358
    %v724 = vmul.f32 %v723, %v358
    %v725 = vmul.f32 %v724, %v723
    %v726 = vmul.f32 0.5, %v725
    %v727 = vsub.f32 1.5, %v726
    %v728 = vmul.f32 %v723, %v727
    %vm729 = vweird.f32 %v358
    %vm730 = vweird.f32 %v723
    %vm731 = vmor %vm729, %vm730
    %v732 = vsel %vm731, %v723, %v728
    %v733 = vrsqrt.pop %v361
    %v734 = vmul.f32 %v733, %v361
    %v735 = vmul.f32 %v734, %v733
    %v736 = vmul.f32 0.5, %v735
    %v737 = vsub.f32 1.5, %v736
    %v738 = vmul.f32 %v733, %v737
    %vm739 = vweird.f32 %v361
    %vm740 = vweird.f32 %v733
    %vm741 = vmor %vm739, %vm740
    %v742 = vsel %vm741, %v733, %v738
    %v743 = vrsqrt.pop %v364
    %v744 = vmul.f32 %v743, %v364
    %v745 = vmul.f32 %v744, %v743
    %v746 = vmul.f32 0.5, %v745
    %v747 = vsub.f32 1.5, %v746
    %v748 = vmul.f32 %v743, %v747
    %vm749 = vweird.f32 %v364
    %vm750 = vweird.f32 %v743
    %vm751 = vmor %vm749, %vm750
    %v752 = vsel %vm751, %v743, %v748
    %v753 = vrsqrt.pop %v367
    %v754 = vmul.f32 %v753, %v367
    %v755 = vmul.f32 %v754, %v753
    %v756 = vmul.f32 0.5, %v755
    %v757 = vsub.f32 1.5, %v756
    %v758 = vmul.f32 %v753, %v757
    %vm759 = vweird.f32 %v367
    %vm760 = vweird.f32 %v753
    %vm761 = vmor %vm759, %vm760
    %v762 = vsel %vm761, %v753, %v758
    %v763 = vrsqrt.pop %v370
    %v764 = vmul.f32 %v763, %v370
    %v765 = vmul.f32 %v764, %v763
    %v766 = vmul.f32 0.5, %v765
    %v767 = vsub.f32 1.5, %v766
    %v768 = vmul.f32 %v763, %v767
    %vm769 = vweird.f32 %v370
    %vm770 = vweird.f32 %v763
    %vm771 = vmor %vm769, %vm770
    %v772 = vsel %vm771, %v763, %v768
    %v773 = vrsqrt.pop %v373
    %v774 = vmul.f32 %v773, %v373
    %v775 = vmul.f32 %v774, %v773
    %v776 = vmul.f32 0.5, %v775
    %v777 = vsub.f32 1.5, %v776
    %v778 = vmul.f32 %v773, %v777
    %vm779 = vweird.f32 %v373
    %vm780 = vweird.f32 %v773
    %vm781 = vmor %vm779, %vm780
    %v782 = vsel %vm781, %v773, %v778
    %v783 = vrsqrt.pop %v376
    %v784 = vmul.f32 %v783, %v376
    %v785 = vmul.f32 %v784, %v783
    %v786 = vmul.f32 0.5, %v785
    %v787 = vsub.f32 1.5, %v786
    %v788 = vmul.f32 %v783, %v787
    %vm789 = vweird.f32 %v376
    %vm790 = vweird.f32 %v783
    %vm791 = vmor %vm789, %vm790
    %v792 = vsel %vm791, %v783, %v788
    %v793 = vrsqrt.pop %v379
    %v794 = vmul.f32 %v793, %v379
    %v795 = vmul.f32 %v794, %v793
    %v796 = vmul.f32 0.5, %v795
    %v797 = vsub.f32 1.5, %v796
    %v798 = vmul.f32 %v793, %v797
    %vm799 = vweird.f32 %v379
    %vm800 = vweird.f32 %v793
    %vm801 = vmor %vm799, %vm800
    %v802 = vsel %vm801, %v793, %v798
    %v803 = vrsqrt.pop %v382
    %v804 = vmul.f32 %v803, %v382
    %v805 = vmul.f32 %v804, %v803
    %v806 = vmul.f32 0.5, %v805
    %v807 = vsub.f32 1.5, %v806
    %v808 = vmul.f32 %v803, %v807
    %vm809 = vweird.f32 %v382
    %vm810 = vweird.f32 %v803
    %vm811 = vmor %vm809, %vm810
    %v812 = vsel %vm811, %v803, %v808
    %v813 = vrsqrt.pop %v385
    %v814 = vmul.f32 %v813, %v385
    %v815 = vmul.f32 %v814, %v813
    %v816 = vmul.f32 0.5, %v815
    %v817 = vsub.f32 1.5, %v816
    %v818 = vmul.f32 %v813, %v817
    %vm819 = vweird.f32 %v385
    %vm820 = vweird.f32 %v813
    %vm821 = vmor %vm819, %vm820
    %v822 = vsel %vm821, %v813, %v818
    %v823 = vrsqrt.pop %v388
    %v824 = vmul.f32 %v823, %v388
    %v825 = vmul.f32 %v824, %v823
    %v826 = vmul.f32 0.5, %v825
    %v827 = vsub.f32 1.5, %v826
    %v828 = vmul.f32 %v823, %v827
    %vm829 = vweird.f32 %v388
    %vm830 = vweird.f32 %v823
    %vm831 = vmor %vm829, %vm830
    %v832 = vsel %vm831, %v823, %v828
    %v833 = vrsqrt.pop %v391
    %v834 = vmul.f32 %v833, %v391
    %v835 = vmul.f32 %v834, %v833
    %v836 = vmul.f32 0.5, %v835
    %v837 = vsub.f32 1.5, %v836
    %v838 = vmul.f32 %v833, %v837
    %vm839 = vweird.f32 %v391
    %vm840 = vweird.f32 %v833
    %vm841 = vmor %vm839, %vm840
    %v842 = vsel %vm841, %v833, %v838
    %v843 = vrsqrt.pop %v394
    %v844 = vmul.f32 %v843, %v394
    %v845 = vmul.f32 %v844, %v843
    %v846 = vmul.f32 0.5, %v845
    %v847 = vsub.f32 1.5, %v846
    %v848 = vmul.f32 %v843, %v847
    %vm849 = vweird.f32 %v394
    %vm850 = vweird.f32 %v843
    %vm851 = vmor %vm849, %vm850
    %v852 = vsel %vm851, %v843, %v848
    %v853 = vrsqrt.pop %v397
    %v854 = vmul.f32 %v853, %v397
    %v855 = vmul.f32 %v854, %v853
    %v856 = vmul.f32 0.5, %v855
    %v857 = vsub.f32 1.5, %v856
    %v858 = vmul.f32 %v853, %v857
    %vm859 = vweird.f32 %v397
    %vm860 = vweird.f32 %v853
    %vm861 = vmor %vm859, %vm860
    %v862 = vsel %vm861, %v853, %v858
    %v863 = vrsqrt.pop %v400
    %v864 = vmul.f32 %v863, %v400
    %v865 = vmul.f32 %v864, %v863
    %v866 = vmul.f32 0.5, %v865
    %v867 = vsub.f32 1.5, %v866
    %v868 = vmul.f32 %v863, %v867
    %vm869 = vweird.f32 %v400
    %vm870 = vweird.f32 %v863
    %vm871 = vmor %vm869, %vm870
    %v872 = vsel %vm871, %v863, %v868
    %v873 = vrsqrt.pop %v403
    %v874 = vmul.f32 %v873, %v403
    %v875 = vmul.f32 %v874, %v873
    %v876 = vmul.f32 0.5, %v875
    %v877 = vsub.f32 1.5, %v876
    %v878 = vmul.f32 %v873, %v877
    %vm879 = vweird.f32 %v403
    %vm880 = vweird.f32 %v873
    %vm881 = vmor %vm879, %vm880
    %v882 = vsel %vm881, %v873, %v878
    %v883 = vrsqrt.pop %v406
    %v884 = vmul.f32 %v883, %v406
    %v885 = vmul.f32 %v884, %v883
    %v886 = vmul.f32 0.5, %v885
    %v887 = vsub.f32 1.5, %v886
    %v888 = vmul.f32 %v883, %v887
    %vm889 = vweird.f32 %v406
    %vm890 = vweird.f32 %v883
    %vm891 = vmor %vm889, %vm890
    %v892 = vsel %vm891, %v883, %v888
    %v893 = vrsqrt.pop %v409
    %v894 = vmul.f32 %v893, %v409
    %v895 = vmul.f32 %v894, %v893
    %v896 = vmul.f32 0.5, %v895
    %v897 = vsub.f32 1.5, %v896
    %v898 = vmul.f32 %v893, %v897
    %vm899 = vweird.f32 %v409
    %vm900 = vweird.f32 %v893
    %vm901 = vmor %vm899, %vm900
    %v902 = vsel %vm901, %v893, %v898
    %v903 = vrsqrt.pop %v412
    %v904 = vmul.f32 %v903, %v412
    %v905 = vmul.f32 %v904, %v903
    %v906 = vmul.f32 0.5, %v905
    %v907 = vsub.f32 1.5, %v906
    %v908 = vmul.f32 %v903, %v907
    %vm909 = vweird.f32 %v412
    %vm910 = vweird.f32 %v903
    %vm911 = vmor %vm909, %vm910
    %v912 = vsel %vm911, %v903, %v908
    %v913 = vrsqrt.pop %v415
    %v914 = vmul.f32 %v913, %v415
    %v915 = vmul.f32 %v914, %v913
    %v916 = vmul.f32 0.5, %v915
    %v917 = vsub.f32 1.5, %v916
    %v918 = vmul.f32 %v913, %v917
    %vm919 = vweird.f32 %v415
    %vm920 = vweird.f32 %v913
    %vm921 = vmor %vm919, %vm920
    %v922 = vsel %vm921, %v913, %v918
    %v923 = vrsqrt.pop %v418
    %v924 = vmul.f32 %v923, %v418
    %v925 = vmul.f32 %v924, %v923
    %v926 = vmul.f32 0.5, %v925
    %v927 = vsub.f32 1.5, %v926
    %v928 = vmul.f32 %v923, %v927
    %vm929 = vweird.f32 %v418
    %vm930 = vweird.f32 %v923
    %vm931 = vmor %vm929, %vm930
    %v932 = vsel %vm931, %v923, %v928
    %v933 = vrsqrt.pop %v421
    %v934 = vmul.f32 %v933, %v421
    %v935 = vmul.f32 %v934, %v933
    %v936 = vmul.f32 0.5, %v935
    %v937 = vsub.f32 1.5, %v936
    %v938 = vmul.f32 %v933, %v937
    %vm939 = vweird.f32 %v421
    %vm940 = vweird.f32 %v933
    %vm941 = vmor %vm939, %vm940
    %v942 = vsel %vm941, %v933, %v938
    %v943 = vrsqrt.pop %v424
    %v944 = vmul.f32 %v943, %v424
    %v945 = vmul.f32 %v944, %v943
    %v946 = vmul.f32 0.5, %v945
    %v947 = vsub.f32 1.5, %v946
    %v948 = vmul.f32 %v943, %v947
    %vm949 = vweird.f32 %v424
    %vm950 = vweird.f32 %v943
    %vm951 = vmor %vm949, %vm950
    %v952 = vsel %vm951, %v943, %v948
    %v953 = vrsqrt.pop %v427
    %v954 = vmul.f32 %v953, %v427
    %v955 = vmul.f32 %v954, %v953
    %v956 = vmul.f32 0.5, %v955
    %v957 = vsub.f32 1.5, %v956
    %v958 = vmul.f32 %v953, %v957
    %vm959 = vweird.f32 %v427
    %vm960 = vweird.f32 %v953
    %vm961 = vmor %vm959, %vm960
    %v962 = vsel %vm961, %v953, %v958
    %v963 = vrsqrt.pop %v430
    %v964 = vmul.f32 %v963, %v430
    %v965 = vmul.f32 %v964, %v963
    %v966 = vmul.f32 0.5, %v965
    %v967 = vsub.f32 1.5, %v966
    %v968 = vmul.f32 %v963, %v967
    %vm969 = vweird.f32 %v430
    %vm970 = vweird.f32 %v963
    %vm971 = vmor %vm969, %vm970
    %v972 = vsel %vm971, %v963, %v968
    %v973 = vrsqrt.pop %v433
    %v974 = vmul.f32 %v973, %v433
    %v975 = vmul.f32 %v974, %v973
    %v976 = vmul.f32 0.5, %v975
    %v977 = vsub.f32 1.5, %v976
    %v978 = vmul.f32 %v973, %v977
    %vm979 = vweird.f32 %v433
    %vm980 = vweird.f32 %v973
    %vm981 = vmor %vm979, %vm980
    %v982 = vsel %vm981, %v973, %v978
    %v983 = vrsqrt.pop %v436
    %v984 = vmul.f32 %v983, %v436
    %v985 = vmul.f32 %v984, %v983
    %v986 = vmul.f32 0.5, %v985
    %v987 = vsub.f32 1.5, %v986
    %v988 = vmul.f32 %v983, %v987
    %vm989 = vweird.f32 %v436
    %vm990 = vweird.f32 %v983
    %vm991 = vmor %vm989, %vm990
    %v992 = vsel %vm991, %v983, %v988
    %v993 = vrsqrt.pop %v439
    %v994 = vmul.f32 %v993, %v439
    %v995 = vmul.f32 %v994, %v993
    %v996 = vmul.f32 0.5, %v995
    %v997 = vsub.f32 1.5, %v996
    %v998 = vmul.f32 %v993, %v997
    %vm999 = vweird.f32 %v439
    %vm1000 = vweird.f32 %v993
    %vm1001 = vmor %vm999, %vm1000
    %v1002 = vsel %vm1001, %v993, %v998
    %v1003 = vrsqrt.pop %v442
    %v1004 = vmul.f32 %v1003, %v442
    %v1005 = vmul.f32 %v1004, %v1003
    %v1006 = vmul.f32 0.5, %v1005
    %v1007 = vsub.f32 1.5, %v1006
    %v1008 = vmul.f32 %v1003, %v1007
    %vm1009 = vweird.f32 %v442
    %vm1010 = vweird.f32 %v1003
    %vm1011 = vmor %vm1009, %vm1010
    %v1012 = vsel %vm1011, %v1003, %v1008
    %v1013 = vrsqrt.pop %v445
    %v1014 = vmul.f32 %v1013, %v445
    %v1015 = vmul.f32 %v1014, %v1013
    %v1016 = vmul.f32 0.5, %v1015
    %v1017 = vsub.f32 1.5, %v1016
    %v1018 = vmul.f32 %v1013, %v1017
    %vm1019 = vweird.f32 %v445
    %vm1020 = vweird.f32 %v1013
    %vm1021 = vmor %vm1019, %vm1020
    %v1022 = vsel %vm1021, %v1013, %v1018
    %v1023 = vrsqrt.pop %v448
    %v1024 = vmul.f32 %v1023, %v448
    %v1025 = vmul.f32 %v1024, %v1023
    %v1026 = vmul.f32 0.5, %v1025
    %v1027 = vsub.f32 1.5, %v1026
    %v1028 = vmul.f32 %v1023, %v1027
    %vm1029 = vweird.f32 %v448
    %vm1030 = vweird.f32 %v1023
    %vm1031 = vmor %vm1029, %vm1030
    %v1032 = vsel %vm1031, %v1023, %v1028
    %v1033 = vrsqrt.pop %v451
    %v1034 = vmul.f32 %v1033, %v451
    %v1035 = vmul.f32 %v1034, %v1033
    %v1036 = vmul.f32 0.5, %v1035
    %v1037 = vsub.f32 1.5, %v1036
    %v1038 = vmul.f32 %v1033, %v1037
    %vm1039 = vweird.f32 %v451
    %vm1040 = vweird.f32 %v1033
    %vm1041 = vmor %vm1039, %vm1040
    %v1042 = vsel %vm1041, %v1033, %v1038
    %v1043 = vrsqrt.pop %v454
    %v1044 = vmul.f32 %v1043, %v454
    %v1045 = vmul.f32 %v1044, %v1043
    %v1046 = vmul.f32 0.5, %v1045
    %v1047 = vsub.f32 1.5, %v1046
    %v1048 = vmul.f32 %v1043, %v1047
    %vm1049 = vweird.f32 %v454
    %vm1050 = vweird.f32 %v1043
    %vm1051 = vmor %vm1049, %vm1050
    %v1052 = vsel %vm1051, %v1043, %v1048
    %v1053 = vrsqrt.pop %v457
    %v1054 = vmul.f32 %v1053, %v457
    %v1055 = vmul.f32 %v1054, %v1053
    %v1056 = vmul.f32 0.5, %v1055
    %v1057 = vsub.f32 1.5, %v1056
    %v1058 = vmul.f32 %v1053, %v1057
    %vm1059 = vweird.f32 %v457
    %vm1060 = vweird.f32 %v1053
    %vm1061 = vmor %vm1059, %vm1060
    %v1062 = vsel %vm1061, %v1053, %v1058
    %v1063 = vrsqrt.pop %v460
    %v1064 = vmul.f32 %v1063, %v460
    %v1065 = vmul.f32 %v1064, %v1063
    %v1066 = vmul.f32 0.5, %v1065
    %v1067 = vsub.f32 1.5, %v1066
    %v1068 = vmul.f32 %v1063, %v1067
    %vm1069 = vweird.f32 %v460
    %vm1070 = vweird.f32 %v1063
    %vm1071 = vmor %vm1069, %vm1070
    %v1072 = vsel %vm1071, %v1063, %v1068
    %v1073 = vrsqrt.pop %v463
    %v1074 = vmul.f32 %v1073, %v463
    %v1075 = vmul.f32 %v1074, %v1073
    %v1076 = vmul.f32 0.5, %v1075
    %v1077 = vsub.f32 1.5, %v1076
    %v1078 = vmul.f32 %v1073, %v1077
    %vm1079 = vweird.f32 %v463
    %vm1080 = vweird.f32 %v1073
    %vm1081 = vmor %vm1079, %vm1080
    %v1082 = vsel %vm1081, %v1073, %v1078
    %v1083 = vrsqrt.pop %v466
    %v1084 = vmul.f32 %v1083, %v466
    %v1085 = vmul.f32 %v1084, %v1083
    %v1086 = vmul.f32 0.5, %v1085
    %v1087 = vsub.f32 1.5, %v1086
    %v1088 = vmul.f32 %v1083, %v1087
    %vm1089 = vweird.f32 %v466
    %vm1090 = vweird.f32 %v1083
    %vm1091 = vmor %vm1089, %vm1090
    %v1092 = vsel %vm1091, %v1083, %v1088
    %v1093 = vrsqrt.pop %v469
    %v1094 = vmul.f32 %v1093, %v469
    %v1095 = vmul.f32 %v1094, %v1093
    %v1096 = vmul.f32 0.5, %v1095
    %v1097 = vsub.f32 1.5, %v1096
    %v1098 = vmul.f32 %v1093, %v1097
    %vm1099 = vweird.f32 %v469
    %vm1100 = vweird.f32 %v1093
    %vm1101 = vmor %vm1099, %vm1100
    %v1102 = vsel %vm1101, %v1093, %v1098
    %v1103 = vrsqrt.pop %v472
    %v1104 = vmul.f32 %v1103, %v472
    %v1105 = vmul.f32 %v1104, %v1103
    %v1106 = vmul.f32 0.5, %v1105
    %v1107 = vsub.f32 1.5, %v1106
    %v1108 = vmul.f32 %v1103, %v1107
    %vm1109 = vweird.f32 %v472
    %vm1110 = vweird.f32 %v1103
    %vm1111 = vmor %vm1109, %vm1110
    %v1112 = vsel %vm1111, %v1103, %v1108
    %v1113 = vmul.f32 %v25, %v482
    %v1114 = vmul.f32 %v26, %v482
    %v1115 = vmul.f32 %v27, %v492
    %v1116 = vmul.f32 %v28, %v492
    %v1117 = vmul.f32 %v29, %v502
    %v1118 = vmul.f32 %v30, %v502
    %v1119 = vmul.f32 %v31, %v512
    %v1120 = vmul.f32 %v32, %v512
    %v1121 = vmul.f32 %v33, %v522
    %v1122 = vmul.f32 %v34, %v522
    %v1123 = vmul.f32 %v35, %v532
    %v1124 = vmul.f32 %v36, %v532
    %v1125 = vmul.f32 %v37, %v542
    %v1126 = vmul.f32 %v38, %v542
    %v1127 = vmul.f32 %v39, %v552
    %v1128 = vmul.f32 %v40, %v552
    %v1129 = vmul.f32 %v41, %v562
    %v1130 = vmul.f32 %v42, %v562
    %v1131 = vmul.f32 %v43, %v572
    %v1132 = vmul.f32 %v44, %v572
    %v1133 = vmul.f32 %v45, %v582
    %v1134 = vmul.f32 %v46, %v582
    %v1135 = vmul.f32 %v47, %v592
    %v1136 = vmul.f32 %v48, %v592
    %v1137 = vmul.f32 %v49, %v602
    %v1138 = vmul.f32 %v50, %v602
    %v1139 = vmul.f32 %v51, %v612
    %v1140 = vmul.f32 %v52, %v612
    %v1141 = vmul.f32 %v53, %v622
    %v1142 = vmul.f32 %v54, %v622
    %v1143 = vmul.f32 %v55, %v632
    %v1144 = vmul.f32 %v56, %v632
    %v1145 = vmul.f32 %v57, %v642
    %v1146 = vmul.f32 %v58, %v642
    %v1147 = vmul.f32 %v59, %v652
    %v1148 = vmul.f32 %v60, %v652
    %v1149 = vmul.f32 %v61, %v662
    %v1150 = vmul.f32 %v62, %v662
    %v1151 = vmul.f32 %v63, %v672
    %v1152 = vmul.f32 %v64, %v672
    %v1153 = vmul.f32 %v65, %v682
    %v1154 = vmul.f32 %v66, %v682
    %v1155 = vmul.f32 %v67, %v692
    %v1156 = vmul.f32 %v68, %v692
    %v1157 = vmul.f32 %v69, %v702
    %v1158 = vmul.f32 %v70, %v702
    %v1159 = vmul.f32 %v71, %v712
    %v1160 = vmul.f32 %v72, %v712
    %v1161 = vmul.f32 %v73, %v722
    %v1162 = vmul.f32 %v74, %v722
    %v1163 = vmul.f32 %v75, %v732
    %v1164 = vmul.f32 %v76, %v732
    %v1165 = vmul.f32 %v77, %v742
    %v1166 = vmul.f32 %v78, %v742
    %v1167 = vmul.f32 %v79, %v752
    %v1168 = vmul.f32 %v80, %v752
    %v1169 = vmul.f32 %v81, %v762
    %v1170 = vmul.f32 %v82, %v762
    %v1171 = vmul.f32 %v83, %v772
    %v1172 = vmul.f32 %v84, %v772
    %v1173 = vmul.f32 %v85, %v782
    %v1174 = vmul.f32 %v86, %v782
    %v1175 = vmul.f32 %v87, %v792
    %v1176 = vmul.f32 %v88, %v792
    %v1177 = vmul.f32 %v89, %v802
    %v1178 = vmul.f32 %v90, %v802
    %v1179 = vmul.f32 %v91, %v812
    %v1180 = vmul.f32 %v92, %v812
    %v1181 = vmul.f32 %v93, %v822
    %v1182 = vmul.f32 %v94, %v822
    %v1183 = vmul.f32 %v95, %v832
    %v1184 = vmul.f32 %v96, %v832
    %v1185 = vmul.f32 %v97, %v842
    %v1186 = vmul.f32 %v98, %v842
    %v1187 = vmul.f32 %v99, %v852
    %v1188 = vmul.f32 %v100, %v852
    %v1189 = vmul.f32 %v101, %v862
    %v1190 = vmul.f32 %v102, %v862
    %v1191 = vmul.f32 %v103, %v872
    %v1192 = vmul.f32 %v104, %v872
    %v1193 = vmul.f32 %v105, %v882
    %v1194 = vmul.f32 %v106, %v882
    %v1195 = vmul.f32 %v107, %v892
    %v1196 = vmul.f32 %v108, %v892
    %v1197 = vmul.f32 %v109, %v902
    %v1198 = vmul.f32 %v110, %v902
    %v1199 = vmul.f32 %v111, %v912
    %v1200 = vmul.f32 %v112, %v912
    %v1201 = vmul.f32 %v113, %v922
    %v1202 = vmul.f32 %v114, %v922
    %v1203 = vmul.f32 %v115, %v932
    %v1204 = vmul.f32 %v116, %v932
    %v1205 = vmul.f32 %v117, %v942
    %v1206 = vmul.f32 %v118, %v942
    %v1207 = vmul.f32 %v119, %v952
    %v1208 = vmul.f32 %v120, %v952
    %v1209 = vmul.f32 %v121, %v962
    %v1210 = vmul.f32 %v122, %v962
    %v1211 = vmul.f32 %v123, %v972
    %v1212 = vmul.f32 %v124, %v972
    %v1213 = vmul.f32 %v125, %v982
    %v1214 = vmul.f32 %v126, %v982
    %v1215 = vmul.f32 %v127, %v992
    %v1216 = vmul.f32 %v128, %v992
    %v1217 = vmul.f32 %v129, %v1002
    %v1218 = vmul.f32 %v130, %v1002
    %v1219 = vmul.f32 %v131, %v1012
    %v1220 = vmul.f32 %v132, %v1012
    %v1221 = vmul.f32 %v133, %v1022
    %v1222 = vmul.f32 %v134, %v1022
    %v1223 = vmul.f32 %v135, %v1032
    %v1224 = vmul.f32 %v136, %v1032
    %v1225 = vmul.f32 %v137, %v1042
    %v1226 = vmul.f32 %v138, %v1042
    %v1227 = vmul.f32 %v139, %v1052
    %v1228 = vmul.f32 %v140, %v1052
    %v1229 = vmul.f32 %v141, %v1062
    %v1230 = vmul.f32 %v142, %v1062
    %v1231 = vmul.f32 %v143, %v1072
    %v1232 = vmul.f32 %v144, %v1072
    %v1233 = vmul.f32 %v145, %v1082
    %v1234 = vmul.f32 %v146, %v1082
    %v1235 = vmul.f32 %v147, %v1092
    %v1236 = vmul.f32 %v148, %v1092
    %v1237 = vmul.f32 %v149, %v1102
    %v1238 = vmul.f32 %v150, %v1102
    %v1239 = vmul.f32 %v151, %v1112
    %v1240 = vmul.f32 %v152, %v1112
    %1241 = vst [vmem:[#allocation5] sm:$0xff] %v1113
    %1242 = vst [vmem:[#allocation5 + $0x8] sm:$0xff] %v1114
    %1243 = vst [vmem:[#allocation5 + $0x10] sm:$0xff] %v1115
    %1244 = vst [vmem:[#allocation5 + $0x18] sm:$0xff] %v1116
    %1245 = vst [vmem:[#allocation5 + $0x20] sm:$0xff] %v1117
    %1246 = vst [vmem:[#allocation5 + $0x28] sm:$0xff] %v1118
    %1247 = vst [vmem:[#allocation5 + $0x30] sm:$0xff] %v1119
    %1248 = vst [vmem:[#allocation5 + $0x38] sm:$0xff] %v1120
    %1249 = vst [vmem:[#allocation5 + $0x40] sm:$0xff] %v1121
    %1250 = vst [vmem:[#allocation5 + $0x48] sm:$0xff] %v1122
    %1251 = vst [vmem:[#allocation5 + $0x50] sm:$0xff] %v1123
    %1252 = vst [vmem:[#allocation5 + $0x58] sm:$0xff] %v1124
    %1253 = vst [vmem:[#allocation5 + $0x60] sm:$0xff] %v1125
    %1254 = vst [vmem:[#allocation5 + $0x68] sm:$0xff] %v1126
    %1255 = vst [vmem:[#allocation5 + $0x70] sm:$0xff] %v1127
    %1256 = vst [vmem:[#allocation5 + $0x78] sm:$0xff] %v1128
    %1257 = vst [vmem:[#allocation5 + $0x80] sm:$0xff] %v1129
    %1258 = vst [vmem:[#allocation5 + $0x88] sm:$0xff] %v1130
    %1259 = vst [vmem:[#allocation5 + $0x90] sm:$0xff] %v1131
    %1260 = vst [vmem:[#allocation5 + $0x98] sm:$0xff] %v1132
    %1261 = vst [vmem:[#allocation5 + $0xa0] sm:$0xff] %v1133
    %1262 = vst [vmem:[#allocation5 + $0xa8] sm:$0xff] %v1134
    %1263 = vst [vmem:[#allocation5 + $0xb0] sm:$0xff] %v1135
    %1264 = vst [vmem:[#allocation5 + $0xb8] sm:$0xff] %v1136
    %1265 = vst [vmem:[#allocation5 + $0xc0] sm:$0xff] %v1137
    %1266 = vst [vmem:[#allocation5 + $0xc8] sm:$0xff] %v1138
    %1267 = vst [vmem:[#allocation5 + $0xd0] sm:$0xff] %v1139
    %1268 = vst [vmem:[#allocation5 + $0xd8] sm:$0xff] %v1140
    %1269 = vst [vmem:[#allocation5 + $0xe0] sm:$0xff] %v1141
    %1270 = vst [vmem:[#allocation5 + $0xe8] sm:$0xff] %v1142
    %1271 = vst [vmem:[#allocation5 + $0xf0] sm:$0xff] %v1143
    %1272 = vst [vmem:[#allocation5 + $0xf8] sm:$0xff] %v1144
    %1273 = vst [vmem:[#allocation5 + $0x100] sm:$0xff] %v1145
    %1274 = vst [vmem:[#allocation5 + $0x108] sm:$0xff] %v1146
    %1275 = vst [vmem:[#allocation5 + $0x110] sm:$0xff] %v1147
    %1276 = vst [vmem:[#allocation5 + $0x118] sm:$0xff] %v1148
    %1277 = vst [vmem:[#allocation5 + $0x120] sm:$0xff] %v1149
    %1278 = vst [vmem:[#allocation5 + $0x128] sm:$0xff] %v1150
    %1279 = vst [vmem:[#allocation5 + $0x130] sm:$0xff] %v1151
    %1280 = vst [vmem:[#allocation5 + $0x138] sm:$0xff] %v1152
    %1281 = vst [vmem:[#allocation5 + $0x140] sm:$0xff] %v1153
    %1282 = vst [vmem:[#allocation5 + $0x148] sm:$0xff] %v1154
    %1283 = vst [vmem:[#allocation5 + $0x150] sm:$0xff] %v1155
    %1284 = vst [vmem:[#allocation5 + $0x158] sm:$0xff] %v1156
    %1285 = vst [vmem:[#allocation5 + $0x160] sm:$0xff] %v1157
    %1286 = vst [vmem:[#allocation5 + $0x168] sm:$0xff] %v1158
    %1287 = vst [vmem:[#allocation5 + $0x170] sm:$0xff] %v1159
    %1288 = vst [vmem:[#allocation5 + $0x178] sm:$0xff] %v1160
    %1289 = vst [vmem:[#allocation5 + $0x180] sm:$0xff] %v1161
    %1290 = vst [vmem:[#allocation5 + $0x188] sm:$0xff] %v1162
    %1291 = vst [vmem:[#allocation5 + $0x190] sm:$0xff] %v1163
    %1292 = vst [vmem:[#allocation5 + $0x198] sm:$0xff] %v1164
    %1293 = vst [vmem:[#allocation5 + $0x1a0] sm:$0xff] %v1165
    %1294 = vst [vmem:[#allocation5 + $0x1a8] sm:$0xff] %v1166
    %1295 = vst [vmem:[#allocation5 + $0x1b0] sm:$0xff] %v1167
    %1296 = vst [vmem:[#allocation5 + $0x1b8] sm:$0xff] %v1168
    %1297 = vst [vmem:[#allocation5 + $0x1c0] sm:$0xff] %v1169
    %1298 = vst [vmem:[#allocation5 + $0x1c8] sm:$0xff] %v1170
    %1299 = vst [vmem:[#allocation5 + $0x1d0] sm:$0xff] %v1171
    %1300 = vst [vmem:[#allocation5 + $0x1d8] sm:$0xff] %v1172
    %1301 = vst [vmem:[#allocation5 + $0x1e0] sm:$0xff] %v1173
    %1302 = vst [vmem:[#allocation5 + $0x1e8] sm:$0xff] %v1174
    %1303 = vst [vmem:[#allocation5 + $0x1f0] sm:$0xff] %v1175
    %1304 = vst [vmem:[#allocation5 + $0x1f8] sm:$0xff] %v1176
    %1305 = vst [vmem:[#allocation5 + $0x200] sm:$0xff] %v1177
    %1306 = vst [vmem:[#allocation5 + $0x208] sm:$0xff] %v1178
    %1307 = vst [vmem:[#allocation5 + $0x210] sm:$0xff] %v1179
    %1308 = vst [vmem:[#allocation5 + $0x218] sm:$0xff] %v1180
    %1309 = vst [vmem:[#allocation5 + $0x220] sm:$0xff] %v1181
    %1310 = vst [vmem:[#allocation5 + $0x228] sm:$0xff] %v1182
    %1311 = vst [vmem:[#allocation5 + $0x230] sm:$0xff] %v1183
    %1312 = vst [vmem:[#allocation5 + $0x238] sm:$0xff] %v1184
    %1313 = vst [vmem:[#allocation5 + $0x240] sm:$0xff] %v1185
    %1314 = vst [vmem:[#allocation5 + $0x248] sm:$0xff] %v1186
    %1315 = vst [vmem:[#allocation5 + $0x250] sm:$0xff] %v1187
    %1316 = vst [vmem:[#allocation5 + $0x258] sm:$0xff] %v1188
    %1317 = vst [vmem:[#allocation5 + $0x260] sm:$0xff] %v1189
    %1318 = vst [vmem:[#allocation5 + $0x268] sm:$0xff] %v1190
    %1319 = vst [vmem:[#allocation5 + $0x270] sm:$0xff] %v1191
    %1320 = vst [vmem:[#allocation5 + $0x278] sm:$0xff] %v1192
    %1321 = vst [vmem:[#allocation5 + $0x280] sm:$0xff] %v1193
    %1322 = vst [vmem:[#allocation5 + $0x288] sm:$0xff] %v1194
    %1323 = vst [vmem:[#allocation5 + $0x290] sm:$0xff] %v1195
    %1324 = vst [vmem:[#allocation5 + $0x298] sm:$0xff] %v1196
    %1325 = vst [vmem:[#allocation5 + $0x2a0] sm:$0xff] %v1197
    %1326 = vst [vmem:[#allocation5 + $0x2a8] sm:$0xff] %v1198
    %1327 = vst [vmem:[#allocation5 + $0x2b0] sm:$0xff] %v1199
    %1328 = vst [vmem:[#allocation5 + $0x2b8] sm:$0xff] %v1200
    %1329 = vst [vmem:[#allocation5 + $0x2c0] sm:$0xff] %v1201
    %1330 = vst [vmem:[#allocation5 + $0x2c8] sm:$0xff] %v1202
    %1331 = vst [vmem:[#allocation5 + $0x2d0] sm:$0xff] %v1203
    %1332 = vst [vmem:[#allocation5 + $0x2d8] sm:$0xff] %v1204
    %1333 = vst [vmem:[#allocation5 + $0x2e0] sm:$0xff] %v1205
    %1334 = vst [vmem:[#allocation5 + $0x2e8] sm:$0xff] %v1206
    %1335 = vst [vmem:[#allocation5 + $0x2f0] sm:$0xff] %v1207
    %1336 = vst [vmem:[#allocation5 + $0x2f8] sm:$0xff] %v1208
    %1337 = vst [vmem:[#allocation5 + $0x300] sm:$0xff] %v1209
    %1338 = vst [vmem:[#allocation5 + $0x308] sm:$0xff] %v1210
    %1339 = vst [vmem:[#allocation5 + $0x310] sm:$0xff] %v1211
    %1340 = vst [vmem:[#allocation5 + $0x318] sm:$0xff] %v1212
    %1341 = vst [vmem:[#allocation5 + $0x320] sm:$0xff] %v1213
    %1342 = vst [vmem:[#allocation5 + $0x328] sm:$0xff] %v1214
    %1343 = vst [vmem:[#allocation5 + $0x330] sm:$0xff] %v1215
    %1344 = vst [vmem:[#allocation5 + $0x338] sm:$0xff] %v1216
    %1345 = vst [vmem:[#allocation5 + $0x340] sm:$0xff] %v1217
    %1346 = vst [vmem:[#allocation5 + $0x348] sm:$0xff] %v1218
    %1347 = vst [vmem:[#allocation5 + $0x350] sm:$0xff] %v1219
    %1348 = vst [vmem:[#allocation5 + $0x358] sm:$0xff] %v1220
    %1349 = vst [vmem:[#allocation5 + $0x360] sm:$0xff] %v1221
    %1350 = vst [vmem:[#allocation5 + $0x368] sm:$0xff] %v1222
    %1351 = vst [vmem:[#allocation5 + $0x370] sm:$0xff] %v1223
    %1352 = vst [vmem:[#allocation5 + $0x378] sm:$0xff] %v1224
    %1353 = vst [vmem:[#allocation5 + $0x380] sm:$0xff] %v1225
    %1354 = vst [vmem:[#allocation5 + $0x388] sm:$0xff] %v1226
    %1355 = vst [vmem:[#allocation5 + $0x390] sm:$0xff] %v1227
    %1356 = vst [vmem:[#allocation5 + $0x398] sm:$0xff] %v1228
    %1357 = vst [vmem:[#allocation5 + $0x3a0] sm:$0xff] %v1229
    %1358 = vst [vmem:[#allocation5 + $0x3a8] sm:$0xff] %v1230
    %1359 = vst [vmem:[#allocation5 + $0x3b0] sm:$0xff] %v1231
    %1360 = vst [vmem:[#allocation5 + $0x3b8] sm:$0xff] %v1232
    %1361 = vst [vmem:[#allocation5 + $0x3c0] sm:$0xff] %v1233
    %1362 = vst [vmem:[#allocation5 + $0x3c8] sm:$0xff] %v1234
    %1363 = vst [vmem:[#allocation5 + $0x3d0] sm:$0xff] %v1235
    %1364 = vst [vmem:[#allocation5 + $0x3d8] sm:$0xff] %v1236
    %1365 = vst [vmem:[#allocation5 + $0x3e0] sm:$0xff] %v1237
    %1366 = vst [vmem:[#allocation5 + $0x3e8] sm:$0xff] %v1238
    %1367 = vst [vmem:[#allocation5 + $0x3f0] sm:$0xff] %v1239
    %1368 = vst [vmem:[#allocation5 + $0x3f8] sm:$0xff] %v1240
    // Predicated region
    $region10: #{tpu_custom_call.1} parent=1 // pred_check
      _
    $region11: #{tpu_custom_call.1} parent=1 // pred_check_branch
      %1370 = sbr.rel (0) target = $region13
    $region12: #{tpu_custom_call.1} parent=1 // pred_region
      %1372 = vsyncadd [#allocation4], 0
      %s1373 = sshll.u32 [#allocation5], 4
      %s1374 = int_to_ptr.vmem [resolvable:$true] %s1373
      %s1375 = sshll.u32 %s1, 4
      %s1376 = int_to_ptr.hbm [resolvable:$true] %s1375
      %1381 = dma.vmem_to_hbm [thread:$0]  %s1374, 16384, %s1376, [#allocation4], 256, 256, 16
    $region13: #{tpu_custom_call.1} parent=1 // pred_fallthru
      _
    // Predicated region
    $region14: #{tpu_custom_call.1} parent=1 // pred_check
      _
    $region15: #{tpu_custom_call.1} parent=1 // pred_check_branch
      %1383 = sbr.rel (0) target = $region17
    $region16: #{tpu_custom_call.1} parent=1 // pred_region
      %1385 = dma.done [#allocation4], 16384
    $region17: #{tpu_custom_call.1} parent=1 // pred_fallthru
      _
    %1386 = vsyncpa [#allocation3], 1
    %1387 = vsyncpa [#allocation4], 1

</llo_original>
